<compile_context>
chip_gen: v5e
topology: v5e:2x2
jax: 0.10.0
libtpu: 0.0.40
codegen_flags: <defaults>
</compile_context>

<pallas_src>
import jax
import jax.numpy as jnp
import numpy as np
from jax import lax
from jax.experimental import pallas as pl
from jax.experimental.pallas import tpu as pltpu


def _bbox_kernel(x_ref, w12_ref, b12_ref, fcp_ref, o_ref, xp_ref):
    """x_ref:   (B, C, S) f32   input, channels-major (NCHW with H*W merged)
       w12_ref: (2, C, C) bf16  BN-folded conv1/conv2 weights (W @ x form)
       b12_ref: (C, 2)    f32   BN-folded conv biases as columns
       fcp_ref: (8, C)    f32   rows 0..3 = fc weight (4, C); row 4[:4] = fc bias; rows 5..7 zero
       o_ref:   (B, 4)    f32   output
       xp_ref:  (C, B*S)  f32   VMEM scratch for the lane-packed activations"""
    B, C, S = x_ref.shape
    L = B * S

    # ---- Pack the batch into the lane axis: (B, C, S) -> (C, B*S) ----------
    # B (static, tiny) masked stores into VMEM scratch; everything downstream
    # runs on lane-dense (C, 128) vregs instead of B half-empty (C, 64) ones.
    for b in range(B):
        xp_ref[:, b * S:(b + 1) * S] = x_ref[b]
    xp = xp_ref[...].astype(jnp.bfloat16)          # (C, L) bf16, MXU-native

    # ---- conv1 (1x1, BN folded) + ReLU -------------------------------------
    h = jnp.dot(w12_ref[0], xp, preferred_element_type=jnp.float32)
    h = jnp.maximum(h + b12_ref[:, 0:1], 0.0)      # (C, L) f32

    # ---- conv2 (1x1, BN folded) + ReLU -------------------------------------
    h = jnp.dot(w12_ref[1], h.astype(jnp.bfloat16),
                preferred_element_type=jnp.float32)
    h = jnp.maximum(h + b12_ref[:, 1:2], 0.0)      # (C, L) f32

    # ---- fc + adaptive avg-pool, both on the MXU ----------------------------
    # t[j, l] = sum_c Wfc[j, c] * h[c, l].  All 8 rows of fcp are used so the
    # lhs stays sublane-aligned; the extra rows are discarded below.
    t = jnp.dot(fcp_ref[...], h, preferred_element_type=jnp.float32)   # (8, L) f32

    # Average-pool matrix with the 1/S scale folded in (rows >= B are zero).
    R = max(8, -(-B // 8) * 8)
    lane = lax.broadcasted_iota(jnp.int32, (R, L), 1)
    row = lax.broadcasted_iota(jnp.int32, (R, L), 0)
    pool = ((lane >= row * S) & (lane < row * S + S)).astype(jnp.float32) * (1.0 / S)

    # out8[r, j] = sum_l pool[r, l] * t[j, l]  -- lane-contracting dot_general
    # ("q @ k^T" dimension numbers): the result lands directly as (batch, 4)
    # rows, so no transpose and a single output store.
    out8 = lax.dot_general(pool, t, (((1,), (1,)), ((), ())),
                           preferred_element_type=jnp.float32)          # (R, 8)

    out = out8[0:B, 0:4] + fcp_ref[4:5, 0:4]       # + fc bias, (B, 4)
    o_ref[...] = jnp.maximum(out, 0.0)             # final ReLU, one store


@jax.jit
def bbox_predictor_pallas(x_nchw, kernel_params):
    """x_nchw: (B, C, H, W) float32.  Returns (B, 4) float32."""
    B, C, H, W = x_nchw.shape
    S = H * W
    w12, b12, fcp = kernel_params
    # Free contiguous reshape only: no wrapper-side transpose or dtype convert
    # (bf16 cast and (C, B*S) lane-packing happen inside the kernel).
    x = x_nchw.reshape(B, C, S)
    # Single invocation, no grid: whole problem lives in VMEM.  (For large B,
    # add a leading "parallel" batch grid axis to feed both v7x TensorCores.)
    return pl.pallas_call(
        _bbox_kernel,
        out_shape=jax.ShapeDtypeStruct((B, 4), jnp.float32),
        scratch_shapes=[pltpu.VMEM((C, B * S), jnp.float32)],
    )(x, w12, b12, fcp)


def _fold_conv_bn(w_oi, b_o, gamma, beta, mean, var, eps=1e-5):
    """Fold 1x1 conv (w: (Cout, Cin), b: (Cout,)) + eval-mode BN into a matmul
    weight (Cout, Cin) and a per-channel bias (Cout,)."""
    scale = gamma / jnp.sqrt(var + eps)
    w_eff = (w_oi * scale[:, None]).astype(jnp.float32)
    b_eff = ((b_o - mean) * scale + beta).astype(jnp.float32)
    return w_eff, b_eff


def make_params(key, inplanes):
    """Deterministic synthetic parameters matching the PyTorch module shapes.
    Returns (packed_kernel_params, logical_f32_params)."""
    C = inplanes
    ks = jax.random.split(key, 6)

    # conv1 / conv2: Conv2d(C, C, 1) weight (C, C, 1, 1) -> (C, C), bias (C,)
    w1 = jax.random.normal(ks[0], (C, C), jnp.float32) * 0.05
    c1b = jax.random.normal(ks[1], (C,), jnp.float32) * 0.05
    w2 = jax.random.normal(ks[2], (C, C), jnp.float32) * 0.05
    c2b = jax.random.normal(ks[3], (C,), jnp.float32) * 0.05
    # fc: Linear(C, 4) weight (4, C), bias (4,)
    wfc = jax.random.normal(ks[4], (4, C), jnp.float32) * 0.05
    bfc = jax.random.normal(ks[5], (4,), jnp.float32) * 0.05

    # BatchNorm2d running stats / affine params (inference mode), non-trivial.
    idx = jnp.arange(C, dtype=jnp.float32)
    gamma1, beta1 = 1.0 + 0.01 * idx, 0.02 * idx
    mean1, var1 = 0.001 * idx, 1.0 + 0.02 * idx
    gamma2, beta2 = 1.0 - 0.005 * idx, -0.01 * idx
    mean2, var2 = -0.002 * idx, 1.0 + 0.01 * idx

    w1e, b1e = _fold_conv_bn(w1, c1b, gamma1, beta1, mean1, var1)
    w2e, b2e = _fold_conv_bn(w2, c2b, gamma2, beta2, mean2, var2)

    # ---- packed kernel operands (7 arrays -> 3 besides x) ----
    w12 = jnp.stack([w1e, w2e]).astype(jnp.bfloat16)       # (2, C, C) bf16
    b12 = jnp.stack([b1e, b2e], axis=1)                    # (C, 2) f32
    fcp = jnp.zeros((8, C), jnp.float32)                   # (8, C) f32
    fcp = fcp.at[0:4, :].set(wfc)                          # fc weight rows 0..3
    fcp = fcp.at[4, 0:4].set(bfc)                          # fc bias in row 4

    kernel_params = (w12, b12, fcp)
    f32_params = (w1e, b1e, w2e, b2e, wfc, bfc)
    return kernel_params, f32_params


def reference_forward(x_nchw, f32_params, match_kernel_precision):
    """Pure-JAX reference of the folded-BN eval-mode forward.  With
    match_kernel_precision=True it mirrors the kernel's bf16 operand rounding
    (x, conv weights, conv1 activation) while keeping f32 accumulation."""
    w1, b1, w2, b2, wfc, bfc = f32_params
    B, C, H, W = x_nchw.shape
    x = x_nchw.reshape(B, C, H * W)
    hi = jax.lax.Precision.HIGHEST

    def rnd(a):
        return a.astype(jnp.bfloat16).astype(jnp.float32) if match_kernel_precision else a

    h = jnp.einsum('oc,bcs->bos', rnd(w1), rnd(x), precision=hi) + b1[None, :, None]
    h = jnp.maximum(h, 0.0)
    h = jnp.einsum('oc,bcs->bos', rnd(w2), rnd(h), precision=hi) + b2[None, :, None]
    h = jnp.maximum(h, 0.0)
    pooled = jnp.mean(h, axis=2)                                    # (B, C)
    out = jnp.dot(pooled, wfc.T, precision=hi) + bfc[None, :]
    return jnp.maximum(out, 0.0)                                    # (B, 4)


if __name__ == "__main__":
    B, C, H, W = 2, 64, 8, 8          # inplanes=64 (module default); B*H*W = 128 lanes
    key = jax.random.PRNGKey(0)
    kx, kp = jax.random.split(key)
    x = jax.random.normal(kx, (B, C, H, W), jnp.float32)
    kernel_params, f32_params = make_params(kp, C)

    out = jax.block_until_ready(bbox_predictor_pallas(x, kernel_params))
    assert out.shape == (B, 4)

    # Tight check vs a reference mirroring the kernel's bf16 operand rounding.
    ref_matched = reference_forward(x, f32_params, match_kernel_precision=True)
    np.testing.assert_allclose(np.asarray(out), np.asarray(ref_matched), rtol=2e-3, atol=2e-3)

    # Sanity check vs the full-f32 module forward (tolerance covers bf16 rounding).
    ref_f32 = reference_forward(x, f32_params, match_kernel_precision=False)
    np.testing.assert_allclose(np.asarray(out), np.asarray(ref_f32), rtol=5e-2, atol=5e-2)

    print("KERNEL_OK")
</pallas_src>

<mosaic_0001>
module attributes {stable_mosaic.version = 11 : i64} {
  func.func @_bbox_kernel(%arg0: memref<2x64x64xf32, #tpu.memory_space<vmem>>, %arg1: memref<2x64x64xbf16, #tpu.memory_space<vmem>>, %arg2: memref<64x2xf32, #tpu.memory_space<vmem>>, %arg3: memref<8x64xf32, #tpu.memory_space<vmem>>, %arg4: memref<2x4xf32, #tpu.memory_space<vmem>>, %arg5: memref<64x128xf32, #tpu.memory_space<vmem>>) attributes {dimension_semantics = [], scalar_prefetch = 0 : i64, scratch_operands = 1 : i64, tpu.core_type = #tpu.core_type<tc>} {
    %c0 = arith.constant 0 : index
    %c0_0 = arith.constant 0 : index
    %c0_1 = arith.constant 0 : index
    %0 = vector.load %arg0[%c0, %c0_0, %c0_1] : memref<2x64x64xf32, #tpu.memory_space<vmem>>, vector<1x64x64xf32>
    %1 = vector.shape_cast %0 : vector<1x64x64xf32> to vector<64x64xf32>
    %c0_2 = arith.constant 0 : index
    %c0_3 = arith.constant 0 : index
    %2 = vector.load %arg5[%c0_2, %c0_3] : memref<64x128xf32, #tpu.memory_space<vmem>>, vector<64x64xf32>
    tpu.vector_store %arg5[%c0_2, %c0_3], %1 {strides = array<i32>} : memref<64x128xf32, #tpu.memory_space<vmem>>, vector<64x64xf32>,
    %c1 = arith.constant 1 : index
    %c0_4 = arith.constant 0 : index
    %c0_5 = arith.constant 0 : index
    %3 = vector.load %arg0[%c1, %c0_4, %c0_5] : memref<2x64x64xf32, #tpu.memory_space<vmem>>, vector<1x64x64xf32>
    %4 = vector.shape_cast %3 : vector<1x64x64xf32> to vector<64x64xf32>
    %c0_6 = arith.constant 0 : index
    %c64 = arith.constant 64 : index
    %5 = vector.load %arg5[%c0_6, %c64] : memref<64x128xf32, #tpu.memory_space<vmem>>, vector<64x64xf32>
    tpu.vector_store %arg5[%c0_6, %c64], %4 {strides = array<i32>} : memref<64x128xf32, #tpu.memory_space<vmem>>, vector<64x64xf32>,
    %c0_7 = arith.constant 0 : index
    %c0_8 = arith.constant 0 : index
    %6 = vector.load %arg5[%c0_7, %c0_8] : memref<64x128xf32, #tpu.memory_space<vmem>>, vector<64x128xf32>
    %7 = arith.truncf %6 : vector<64x128xf32> to vector<64x128xbf16>
    %c0_9 = arith.constant 0 : index
    %c0_10 = arith.constant 0 : index
    %c0_11 = arith.constant 0 : index
    %8 = vector.load %arg1[%c0_9, %c0_10, %c0_11] : memref<2x64x64xbf16, #tpu.memory_space<vmem>>, vector<1x64x64xbf16>
    %9 = vector.shape_cast %8 : vector<1x64x64xbf16> to vector<64x64xbf16>
    %cst = arith.constant dense<0.000000e+00> : vector<64x128xf32>
    %10 = tpu.matmul %9, %7, %cst {dimension_numbers = #tpu.dot_dimension_numbers<[1], [0], [0], [1], [0, 0, 1, 1], [], []>} : vector<64x64xbf16>, vector<64x128xbf16>, vector<64x128xf32> -> vector<64x128xf32>
    %c0_12 = arith.constant 0 : index
    %c0_13 = arith.constant 0 : index
    %11 = vector.load %arg2[%c0_12, %c0_13] : memref<64x2xf32, #tpu.memory_space<vmem>>, vector<64x1xf32>
    %12 = vector.broadcast %11 : vector<64x1xf32> to vector<64x128xf32>
    %13 = arith.addf %10, %12 : vector<64x128xf32>
    %cst_14 = arith.constant 0.000000e+00 : f32
    %14 = vector.broadcast %cst_14 : f32 to vector<64x128xf32>
    %15 = arith.maximumf %13, %14 : vector<64x128xf32>
    %c1_15 = arith.constant 1 : index
    %c0_16 = arith.constant 0 : index
    %c0_17 = arith.constant 0 : index
    %16 = vector.load %arg1[%c1_15, %c0_16, %c0_17] : memref<2x64x64xbf16, #tpu.memory_space<vmem>>, vector<1x64x64xbf16>
    %17 = vector.shape_cast %16 : vector<1x64x64xbf16> to vector<64x64xbf16>
    %18 = arith.truncf %15 : vector<64x128xf32> to vector<64x128xbf16>
    %cst_18 = arith.constant dense<0.000000e+00> : vector<64x128xf32>
    %19 = tpu.matmul %17, %18, %cst_18 {dimension_numbers = #tpu.dot_dimension_numbers<[1], [0], [0], [1], [0, 0, 1, 1], [], []>} : vector<64x64xbf16>, vector<64x128xbf16>, vector<64x128xf32> -> vector<64x128xf32>
    %c0_19 = arith.constant 0 : index
    %c1_20 = arith.constant 1 : index
    %20 = vector.load %arg2[%c0_19, %c1_20] : memref<64x2xf32, #tpu.memory_space<vmem>>, vector<64x1xf32>
    %21 = vector.broadcast %20 : vector<64x1xf32> to vector<64x128xf32>
    %22 = arith.addf %19, %21 : vector<64x128xf32>
    %cst_21 = arith.constant 0.000000e+00 : f32
    %23 = vector.broadcast %cst_21 : f32 to vector<64x128xf32>
    %24 = arith.maximumf %22, %23 : vector<64x128xf32>
    %c0_22 = arith.constant 0 : index
    %c0_23 = arith.constant 0 : index
    %25 = vector.load %arg3[%c0_22, %c0_23] : memref<8x64xf32, #tpu.memory_space<vmem>>, vector<8x64xf32>
    %cst_24 = arith.constant dense<0.000000e+00> : vector<8x128xf32>
    %26 = tpu.matmul %25, %24, %cst_24 {dimension_numbers = #tpu.dot_dimension_numbers<[1], [0], [0], [1], [0, 0, 1, 1], [], []>} : vector<8x64xf32>, vector<64x128xf32>, vector<8x128xf32> -> vector<8x128xf32>
    %27 = tpu.iota {dimensions = array<i32: 1>} : vector<8x128xi32>
    %28 = tpu.iota {dimensions = array<i32: 0>} : vector<8x128xi32>
    %c64_i32 = arith.constant 64 : i32
    %29 = vector.broadcast %c64_i32 : i32 to vector<8x128xi32>
    %30 = arith.muli %28, %29 : vector<8x128xi32>
    %31 = arith.cmpi sge, %27, %30 : vector<8x128xi32>
    %c64_i32_25 = arith.constant 64 : i32
    %32 = vector.broadcast %c64_i32_25 : i32 to vector<8x128xi32>
    %33 = arith.muli %28, %32 : vector<8x128xi32>
    %c64_i32_26 = arith.constant 64 : i32
    %34 = vector.broadcast %c64_i32_26 : i32 to vector<8x128xi32>
    %35 = arith.addi %33, %34 : vector<8x128xi32>
    %36 = arith.cmpi slt, %27, %35 : vector<8x128xi32>
    %37 = arith.andi %31, %36 : vector<8x128xi1>
    %38 = arith.extui %37 : vector<8x128xi1> to vector<8x128xi32>
    %39 = arith.sitofp %38 : vector<8x128xi32> to vector<8x128xf32>
    %cst_27 = arith.constant 1.562500e-02 : f32
    %40 = vector.broadcast %cst_27 : f32 to vector<8x128xf32>
    %41 = arith.mulf %39, %40 : vector<8x128xf32>
    %cst_28 = arith.constant dense<0.000000e+00> : vector<8x8xf32>
    %42 = tpu.matmul %41, %26, %cst_28 {dimension_numbers = #tpu.dot_dimension_numbers<[1], [1], [0], [0], [0, 0, 1, 0], [], []>} : vector<8x128xf32>, vector<8x128xf32>, vector<8x8xf32> -> vector<8x8xf32>
    %43 = vector.extract_strided_slice %42 {offsets = [0, 0], sizes = [2, 4], strides = [1, 1]} : vector<8x8xf32> to vector<2x4xf32>
    %c4 = arith.constant 4 : index
    %c0_29 = arith.constant 0 : index
    %44 = vector.load %arg3[%c4, %c0_29] : memref<8x64xf32, #tpu.memory_space<vmem>>, vector<1x4xf32>
    %45 = vector.broadcast %44 : vector<1x4xf32> to vector<2x4xf32>
    %46 = arith.addf %43, %45 : vector<2x4xf32>
    %cst_30 = arith.constant 0.000000e+00 : f32
    %47 = vector.broadcast %cst_30 : f32 to vector<2x4xf32>
    %48 = arith.maximumf %46, %47 : vector<2x4xf32>
    %c0_31 = arith.constant 0 : index
    %c0_32 = arith.constant 0 : index
    %49 = vector.load %arg4[%c0_31, %c0_32] : memref<2x4xf32, #tpu.memory_space<vmem>>, vector<2x4xf32>
    tpu.vector_store %arg4[%c0_31, %c0_32], %48 {strides = array<i32>} : memref<2x4xf32, #tpu.memory_space<vmem>>, vector<2x4xf32>,
    return
  }
}

</mosaic_0001>

<llo_original>
// kernel: bbox_predictor_pallas.1
$region0: #{bbox_predictor_pallas.1}
  #allocation0 [shape = 'u32[]', space=smem, size = 0x4, offset = 0x4, fixed_abs, tag = 'smem constant byte address 0x4 - core index']
  #allocation1 [shape = 'u32[72,128]{1,0:T(1,128)}', space=vmem, size = 0x9000, scoped, tag = 'internal scratch']
  #allocation2 [shape = 'f32[64,128]{1,0:T(8,128)}', space=vmem, size = 0x8000, scoped, tag = 'scratch operand']
  %s0 = inlined_call_operand.vmem [shape: f32[2,64,64], index: 0, kind: input, shape index: {}]
  %s1 = inlined_call_operand.vmem [shape: bf16[2,64,64], index: 1, kind: input, shape index: {}]
  %s2 = inlined_call_operand.vmem [shape: f32[64,2], index: 2, kind: input, shape index: {}]
  %s3 = inlined_call_operand.vmem [shape: f32[8,64], index: 3, kind: input, shape index: {}]
  %s4 = inlined_call_operand.hbm [shape: f32[2,4], index: 4, kind: output, shape index: {}]
  %s5 = sld [smem:[#allocation0]]
  $region26: #{bbox_predictor_pallas.1} parent=0
    _
  %s7 = ssub.s32 1, %s5
  %s8 = scalar_select 0, %s7, %s5
  $region1: #{bbox_predictor_pallas.1} parent=0
    #allocation3 [shape = 'u8[1024]{0}', space=vmem, size = 0x400, scoped, tag = 'output window, operand 0, single buffered']
    #allocation4 [shape = 's32[1]{0}', space=sflag, size = 0x4, scoped, tag = 'scoped memory for bbox_predictor_pallas.1']
    %9 = vsyncpa [#allocation4], 0
    // Predicated region
    $region2: #{bbox_predictor_pallas.1} parent=1 // pred_check
      _
    $region3: #{bbox_predictor_pallas.1} parent=1 // pred_check_branch
      %11 = sbr.rel (0) target = $region5
    $region4: #{bbox_predictor_pallas.1} parent=1 // pred_region
      _
    $region5: #{bbox_predictor_pallas.1} parent=1 // pred_fallthru
      _
    // Predicated region
    $region6: #{bbox_predictor_pallas.1} parent=1 // pred_check
      _
    $region7: #{bbox_predictor_pallas.1} parent=1 // pred_check_branch
      %13 = sbr.rel (0) target = $region9
    $region8: #{bbox_predictor_pallas.1} parent=1 // pred_region
      _
    $region9: #{bbox_predictor_pallas.1} parent=1 // pred_fallthru
      _
    // Predicated region
    $region10: #{bbox_predictor_pallas.1} parent=1 // pred_check
      _
    $region11: #{bbox_predictor_pallas.1} parent=1 // pred_check_branch
      %15 = sbr.rel (0) target = $region13
    $region12: #{bbox_predictor_pallas.1} parent=1 // pred_region
      _
    $region13: #{bbox_predictor_pallas.1} parent=1 // pred_fallthru
      _
    // Predicated region
    $region14: #{bbox_predictor_pallas.1} parent=1 // pred_check
      _
    $region15: #{bbox_predictor_pallas.1} parent=1 // pred_check_branch
      %17 = sbr.rel (0) target = $region17
    $region16: #{bbox_predictor_pallas.1} parent=1 // pred_region
      _
    $region17: #{bbox_predictor_pallas.1} parent=1 // pred_fallthru
      _
    %v19 = vld [vmem:[%s0] sm:$0xff]
    %v20 = vld [vmem:[%s0 + $0x8] sm:$0xff]
    %v21 = vld [vmem:[%s0 + $0x10] sm:$0xff]
    %v22 = vld [vmem:[%s0 + $0x18] sm:$0xff]
    %v23 = vld [vmem:[%s0 + $0x20] sm:$0xff]
    %v24 = vld [vmem:[%s0 + $0x28] sm:$0xff]
    %v25 = vld [vmem:[%s0 + $0x30] sm:$0xff]
    %v26 = vld [vmem:[%s0 + $0x38] sm:$0xff]
    %vm27 = vcmask 523264
    %28 = vst.msk [vmem:[#allocation2] sm:$0xff] %vm27, %v19
    %29 = vst.msk [vmem:[#allocation2 + $0x8] sm:$0xff] %vm27, %v20
    %30 = vst.msk [vmem:[#allocation2 + $0x10] sm:$0xff] %vm27, %v21
    %31 = vst.msk [vmem:[#allocation2 + $0x18] sm:$0xff] %vm27, %v22
    %32 = vst.msk [vmem:[#allocation2 + $0x20] sm:$0xff] %vm27, %v23
    %33 = vst.msk [vmem:[#allocation2 + $0x28] sm:$0xff] %vm27, %v24
    %34 = vst.msk [vmem:[#allocation2 + $0x30] sm:$0xff] %vm27, %v25
    %35 = vst.msk [vmem:[#allocation2 + $0x38] sm:$0xff] %vm27, %v26
    %s36 = scalar_lea.vmem %s0, 64
    %v37 = vld [vmem:[%s36] sm:$0xff]
    %v38 = vld [vmem:[%s36 + $0x8] sm:$0xff]
    %v39 = vld [vmem:[%s36 + $0x10] sm:$0xff]
    %v40 = vld [vmem:[%s36 + $0x18] sm:$0xff]
    %v41 = vld [vmem:[%s36 + $0x20] sm:$0xff]
    %v42 = vld [vmem:[%s36 + $0x28] sm:$0xff]
    %v43 = vld [vmem:[%s36 + $0x30] sm:$0xff]
    %v44 = vld [vmem:[%s36 + $0x38] sm:$0xff]
    %53 = vrot.lane.b32.xlu0 %v37, 64
    %v54 = vpop.permute.xlu0 %53
    %55 = vrot.lane.b32.xlu0 %v38, 64
    %v56 = vpop.permute.xlu0 %55
    %57 = vrot.lane.b32.xlu0 %v39, 64
    %v58 = vpop.permute.xlu0 %57
    %59 = vrot.lane.b32.xlu0 %v40, 64
    %v60 = vpop.permute.xlu0 %59
    %61 = vrot.lane.b32.xlu0 %v41, 64
    %v62 = vpop.permute.xlu0 %61
    %63 = vrot.lane.b32.xlu0 %v42, 64
    %v64 = vpop.permute.xlu0 %63
    %65 = vrot.lane.b32.xlu0 %v43, 64
    %v66 = vpop.permute.xlu0 %65
    %67 = vrot.lane.b32.xlu0 %v44, 64
    %v68 = vpop.permute.xlu0 %67
    %vm77 = vcmask 1048064
    %78 = vst.msk [vmem:[#allocation2] sm:$0xff] %vm77, %v54
    %79 = vst.msk [vmem:[#allocation2 + $0x8] sm:$0xff] %vm77, %v56
    %80 = vst.msk [vmem:[#allocation2 + $0x10] sm:$0xff] %vm77, %v58
    %81 = vst.msk [vmem:[#allocation2 + $0x18] sm:$0xff] %vm77, %v60
    %82 = vst.msk [vmem:[#allocation2 + $0x20] sm:$0xff] %vm77, %v62
    %83 = vst.msk [vmem:[#allocation2 + $0x28] sm:$0xff] %vm77, %v64
    %84 = vst.msk [vmem:[#allocation2 + $0x30] sm:$0xff] %vm77, %v66
    %85 = vst.msk [vmem:[#allocation2 + $0x38] sm:$0xff] %vm77, %v68
    %v86 = vld [vmem:[#allocation2] sm:$0xff]
    %v87 = vld [vmem:[#allocation2 + $0x8] sm:$0xff]
    %v88 = vld [vmem:[#allocation2 + $0x10] sm:$0xff]
    %v89 = vld [vmem:[#allocation2 + $0x18] sm:$0xff]
    %v90 = vld [vmem:[#allocation2 + $0x20] sm:$0xff]
    %v91 = vld [vmem:[#allocation2 + $0x28] sm:$0xff]
    %v92 = vld [vmem:[#allocation2 + $0x30] sm:$0xff]
    %v93 = vld [vmem:[#allocation2 + $0x38] sm:$0xff]
    %v94 = vpack.c.bf16 %v87, %v86
    %v95 = vpack.c.bf16 %v89, %v88
    %v96 = vpack.c.bf16 %v91, %v90
    %v97 = vpack.c.bf16 %v93, %v92
    %v98 = vld [vmem:[%s1] sm:$0xf]
    %v99 = vld [vmem:[%s1 + $0x4] sm:$0xf]
    %v100 = vld [vmem:[%s1 + $0x8] sm:$0xf]
    %v101 = vld [vmem:[%s1 + $0xc] sm:$0xf]
    %v102 = vld [vmem:[%s1 + $0x10] sm:$0xf]
    %v103 = vld [vmem:[%s1 + $0x14] sm:$0xf]
    %v104 = vld [vmem:[%s1 + $0x18] sm:$0xf]
    %v105 = vld [vmem:[%s1 + $0x1c] sm:$0xf]
    %v106 = vld [vmem:[%s2] sm:$0xff]
    %v107 = vld [vmem:[%s2 + $0x8] sm:$0xff]
    %v108 = vld [vmem:[%s2 + $0x10] sm:$0xff]
    %v109 = vld [vmem:[%s2 + $0x18] sm:$0xff]
    %v110 = vld [vmem:[%s2 + $0x20] sm:$0xff]
    %v111 = vld [vmem:[%s2 + $0x28] sm:$0xff]
    %v112 = vld [vmem:[%s2 + $0x30] sm:$0xff]
    %v113 = vld [vmem:[%s2 + $0x38] sm:$0xff]
    %115 = vset.pattern.permute.xlu0 0
    %116 = vperm.xlu0 %115, %v106
    %v117 = vpop.permute.xlu0 %116
    %120 = vset.pattern.permute.xlu0 0
    %121 = vperm.xlu0 %120, %v107
    %v122 = vpop.permute.xlu0 %121
    %125 = vset.pattern.permute.xlu0 0
    %126 = vperm.xlu0 %125, %v108
    %v127 = vpop.permute.xlu0 %126
    %130 = vset.pattern.permute.xlu0 0
    %131 = vperm.xlu0 %130, %v109
    %v132 = vpop.permute.xlu0 %131
    %135 = vset.pattern.permute.xlu0 0
    %136 = vperm.xlu0 %135, %v110
    %v137 = vpop.permute.xlu0 %136
    %140 = vset.pattern.permute.xlu0 0
    %141 = vperm.xlu0 %140, %v111
    %v142 = vpop.permute.xlu0 %141
    %145 = vset.pattern.permute.xlu0 0
    %146 = vperm.xlu0 %145, %v112
    %v147 = vpop.permute.xlu0 %146
    %150 = vset.pattern.permute.xlu0 0
    %151 = vperm.xlu0 %150, %v113
    %v152 = vpop.permute.xlu0 %151
    %v162 = vunpack.c.l.b16 %v98
    %v163 = vunpack.c.l.b16 %v99
    %v164 = vunpack.c.l.b16 %v100
    %v165 = vunpack.c.l.b16 %v101
    %v166 = vunpack.c.l.b16 %v102
    %v167 = vunpack.c.l.b16 %v103
    %v168 = vunpack.c.l.b16 %v104
    %v169 = vunpack.c.l.b16 %v105
    %v170 = vpack.c.b16 %v163, %v162
    %v171 = vpack.c.b16 %v165, %v164
    %v172 = vpack.c.b16 %v167, %v166
    %v173 = vpack.c.b16 %v169, %v168
    %v175 = vsel %vm27, %v170, 0
    %v178 = vsel %vm27, %v171, 0
    %v181 = vsel %vm27, %v172, 0
    %v184 = vsel %vm27, %v173, 0
    %186 = vmatpush.bf16.msra.mxu0 0
    %187 = vmatpush.bf16.msra.mxu0 0
    %188 = vmatpush.bf16.msra.mxu0 0
    %189 = vmatpush.bf16.msra.mxu0 0
    %190 = vmatpush.bf16.msra.mxu0 %v97
    %191 = vmatpush.bf16.msra.mxu0 %v96
    %192 = vmatpush.bf16.msra.mxu0 %v95
    %193 = vmatpush.bf16.msra.mxu0 %v94
    %194 = vmatmul.bf16.gmra.mxu0 %v175
    %v195 = vpop.f32.mrf.mxu0
    %v196 = vadd.f32 %v117, %v195
    %v197 = vpop.f32.mrf.mxu0
    %v198 = vadd.f32 %v122, %v197
    %199 = vmatmul.bf16.gmra.mxu0 %v178
    %v200 = vpop.f32.mrf.mxu0
    %v201 = vadd.f32 %v127, %v200
    %v202 = vpop.f32.mrf.mxu0
    %v203 = vadd.f32 %v132, %v202
    %204 = vmatmul.bf16.gmra.mxu0 %v181
    %v205 = vpop.f32.mrf.mxu0
    %v206 = vadd.f32 %v137, %v205
    %v207 = vpop.f32.mrf.mxu0
    %v208 = vadd.f32 %v142, %v207
    %209 = vmatmul.bf16.gmra.mxu0 %v184
    %v210 = vpop.f32.mrf.mxu0
    %v211 = vadd.f32 %v147, %v210
    %v212 = vpop.f32.mrf.mxu0
    %v213 = vadd.f32 %v152, %v212
    %214 = vdwg.mxu0
    %v215 = vmax.f32 %v196, 0.0
    %v216 = vmax.f32 %v198, 0.0
    %v217 = vmax.f32 %v201, 0.0
    %v218 = vmax.f32 %v203, 0.0
    %v219 = vmax.f32 %v206, 0.0
    %v220 = vmax.f32 %v208, 0.0
    %v221 = vmax.f32 %v211, 0.0
    %v222 = vmax.f32 %v213, 0.0
    %s223 = scalar_lea.vmem %s1, 32
    %v224 = vld [vmem:[%s223] sm:$0xf]
    %v225 = vld [vmem:[%s223 + $0x4] sm:$0xf]
    %v226 = vld [vmem:[%s223 + $0x8] sm:$0xf]
    %v227 = vld [vmem:[%s223 + $0xc] sm:$0xf]
    %v228 = vld [vmem:[%s223 + $0x10] sm:$0xf]
    %v229 = vld [vmem:[%s223 + $0x14] sm:$0xf]
    %v230 = vld [vmem:[%s223 + $0x18] sm:$0xf]
    %v231 = vld [vmem:[%s223 + $0x1c] sm:$0xf]
    %v232 = vpack.c.bf16 %v216, %v215
    %v233 = vpack.c.bf16 %v218, %v217
    %v234 = vpack.c.bf16 %v220, %v219
    %v235 = vpack.c.bf16 %v222, %v221
    %236 = vset.pattern.permute.xlu0 1
    %237 = vperm.xlu0 %236, %v106
    %v238 = vpop.permute.xlu0 %237
    %240 = vset.pattern.permute.xlu0 1
    %241 = vperm.xlu0 %240, %v107
    %v242 = vpop.permute.xlu0 %241
    %244 = vset.pattern.permute.xlu0 1
    %245 = vperm.xlu0 %244, %v108
    %v246 = vpop.permute.xlu0 %245
    %248 = vset.pattern.permute.xlu0 1
    %249 = vperm.xlu0 %248, %v109
    %v250 = vpop.permute.xlu0 %249
    %252 = vset.pattern.permute.xlu0 1
    %253 = vperm.xlu0 %252, %v110
    %v254 = vpop.permute.xlu0 %253
    %256 = vset.pattern.permute.xlu0 1
    %257 = vperm.xlu0 %256, %v111
    %v258 = vpop.permute.xlu0 %257
    %260 = vset.pattern.permute.xlu0 1
    %261 = vperm.xlu0 %260, %v112
    %v262 = vpop.permute.xlu0 %261
    %264 = vset.pattern.permute.xlu0 1
    %265 = vperm.xlu0 %264, %v113
    %v266 = vpop.permute.xlu0 %265
    %v276 = vunpack.c.l.b16 %v224
    %v277 = vunpack.c.l.b16 %v225
    %v278 = vunpack.c.l.b16 %v226
    %v279 = vunpack.c.l.b16 %v227
    %v280 = vunpack.c.l.b16 %v228
    %v281 = vunpack.c.l.b16 %v229
    %v282 = vunpack.c.l.b16 %v230
    %v283 = vunpack.c.l.b16 %v231
    %v284 = vpack.c.b16 %v277, %v276
    %v285 = vpack.c.b16 %v279, %v278
    %v286 = vpack.c.b16 %v281, %v280
    %v287 = vpack.c.b16 %v283, %v282
    %v289 = vsel %vm27, %v284, 0
    %v292 = vsel %vm27, %v285, 0
    %v295 = vsel %vm27, %v286, 0
    %v298 = vsel %vm27, %v287, 0
    %300 = vmatpush.bf16.msra.mxu0 0
    %301 = vmatpush.bf16.msra.mxu0 0
    %302 = vmatpush.bf16.msra.mxu0 0
    %303 = vmatpush.bf16.msra.mxu0 0
    %304 = vmatpush.bf16.msra.mxu0 %v235
    %305 = vmatpush.bf16.msra.mxu0 %v234
    %306 = vmatpush.bf16.msra.mxu0 %v233
    %307 = vmatpush.bf16.msra.mxu0 %v232
    %308 = vmatmul.bf16.gmra.mxu0 %v289
    %v309 = vpop.f32.mrf.mxu0
    %v310 = vadd.f32 %v238, %v309
    %v311 = vpop.f32.mrf.mxu0
    %v312 = vadd.f32 %v242, %v311
    %313 = vmatmul.bf16.gmra.mxu0 %v292
    %v314 = vpop.f32.mrf.mxu0
    %v315 = vadd.f32 %v246, %v314
    %v316 = vpop.f32.mrf.mxu0
    %v317 = vadd.f32 %v250, %v316
    %318 = vmatmul.bf16.gmra.mxu0 %v295
    %v319 = vpop.f32.mrf.mxu0
    %v320 = vadd.f32 %v254, %v319
    %v321 = vpop.f32.mrf.mxu0
    %v322 = vadd.f32 %v258, %v321
    %323 = vmatmul.bf16.gmra.mxu0 %v298
    %v324 = vpop.f32.mrf.mxu0
    %v325 = vadd.f32 %v262, %v324
    %v326 = vpop.f32.mrf.mxu0
    %v327 = vadd.f32 %v266, %v326
    %328 = vdwg.mxu0
    %v329 = vmax.f32 %v310, 0.0
    %v330 = vmax.f32 %v312, 0.0
    %v331 = vmax.f32 %v315, 0.0
    %v332 = vmax.f32 %v317, 0.0
    %v333 = vmax.f32 %v320, 0.0
    %v334 = vmax.f32 %v322, 0.0
    %v335 = vmax.f32 %v325, 0.0
    %v336 = vmax.f32 %v327, 0.0
    %v337 = vld [vmem:[%s3] sm:$0xff]
    %v339 = vsel %vm27, %v337, 0
    %341 = vmatpush.msra.mxu0 0.0
    %342 = vmatpush.msra.mxu0 0.0
    %343 = vmatpush.msra.mxu0 0.0
    %344 = vmatpush.msra.mxu0 0.0
    %345 = vmatpush.msra.mxu0 0.0
    %346 = vmatpush.msra.mxu0 0.0
    %347 = vmatpush.msra.mxu0 0.0
    %348 = vmatpush.msra.mxu0 0.0
    %349 = vmatpush.msra.mxu0 %v336
    %350 = vmatpush.msra.mxu0 %v335
    %351 = vmatpush.msra.mxu0 %v334
    %352 = vmatpush.msra.mxu0 %v333
    %353 = vmatpush.msra.mxu0 %v332
    %354 = vmatpush.msra.mxu0 %v331
    %355 = vmatpush.msra.mxu0 %v330
    %356 = vmatpush.msra.mxu0 %v329
    %357 = vmatmul.f32.gmra.mxu0 %v339
    %v358 = vpop.f32.mrf.mxu0
    %v359 = vadd.f32 0.0, %v358
    %360 = vdwg.mxu0
    %v361 = vlaneseq
    %v362 = vand.u32 %v361, 127
    %v363 = vlaneseq
    %v364 = vshrl.u32 %v363, 7
    %v365 = vmul.u32 %v364, 64
    %vm366 = vcmp.ge.s32.totalorder %v362, %v365
    %v367 = vadd.s32 %v365, 64
    %vm368 = vcmp.lt.s32.totalorder %v362, %v367
    %vm369 = vmand %vm366, %vm368
    %v370 = vsel %vm369, 1, 0
    %v371 = vcvt.s32.f32 %v370
    %v372 = vmul.f32 %v371, 0.015625
    %373 = vmatpush.xpose.msra.mxu0 0.0
    %374 = vmatpush.xpose.msra.mxu0 0.0
    %375 = vmatpush.xpose.msra.mxu0 0.0
    %376 = vmatpush.xpose.msra.mxu0 0.0
    %377 = vmatpush.xpose.msra.mxu0 0.0
    %378 = vmatpush.xpose.msra.mxu0 0.0
    %379 = vmatpush.xpose.msra.mxu0 0.0
    %380 = vmatpush.xpose.msra.mxu0 0.0
    %381 = vmatpush.xpose.msra.mxu0 0.0
    %382 = vmatpush.xpose.msra.mxu0 0.0
    %383 = vmatpush.xpose.msra.mxu0 0.0
    %384 = vmatpush.xpose.msra.mxu0 0.0
    %385 = vmatpush.xpose.msra.mxu0 0.0
    %386 = vmatpush.xpose.msra.mxu0 0.0
    %387 = vmatpush.xpose.msra.mxu0 0.0
    %388 = vmatpush.xpose.msra.mxu0 %v359
    %389 = vmatmul.f32.gmra.mxu0 %v372
    %v390 = vpop.f32.mrf.mxu0
    %v391 = vadd.f32 0.0, %v390
    %392 = vdwg.mxu0
    %v393 = vld [vmem:[%s3 + $0x4] sm:$0x1]
    %v394 = vperm.slane %v393, 0
    %v395 = vadd.f32 %v391, %v394
    %v396 = vmax.f32 %v395, 0.0
    %vm397 = vcmask 25600
    %398 = vst.msk [vmem:[#allocation3] sm:$0x3] %vm397, %v396
    // Predicated region
    $region18: #{bbox_predictor_pallas.1} parent=1 // pred_check
      _
    $region19: #{bbox_predictor_pallas.1} parent=1 // pred_check_branch
      %400 = sbr.rel (0) target = $region21
    $region20: #{bbox_predictor_pallas.1} parent=1 // pred_region
      %402 = vsyncadd [#allocation4], 0
      %s404 = sshll.u32 [#allocation3], 4
      %s405 = int_to_ptr.vmem [resolvable:$true] %s404
      %s406 = sshll.u32 %s4, 4
      %s407 = int_to_ptr.hbm [resolvable:$true] %s406
      %409 = dma.vmem_to_hbm [thread:$0]  %s405, 32, %s407, [#allocation4]
    $region21: #{bbox_predictor_pallas.1} parent=1 // pred_fallthru
      _
    // Predicated region
    $region22: #{bbox_predictor_pallas.1} parent=1 // pred_check
      _
    $region23: #{bbox_predictor_pallas.1} parent=1 // pred_check_branch
      %411 = sbr.rel (0) target = $region25
    $region24: #{bbox_predictor_pallas.1} parent=1 // pred_region
      %413 = dma.done [#allocation4], 32
    $region25: #{bbox_predictor_pallas.1} parent=1 // pred_fallthru
      _
    %414 = vsyncpa [#allocation4], 1

</llo_original>
